<compile_context>
chip_gen: v7x
topology: tpu7x:2x2x1
jax: 0.10.0
libtpu: 0.0.40
codegen_flags: <defaults>
</compile_context>

<pallas_src>
import jax
import jax.numpy as jnp
from jax.experimental import pallas as pl
from jax.experimental.pallas import tpu as pltpu


def gemv_bias_kernel(x_ref, w_ref, b_ref, o_ref):
    # x_ref: (TB, Fp) VMEM tile, streamed over the batch grid (double-buffered).
    # w_ref: (Fp, P)  VMEM, constant index_map -> stays resident across steps.
    # b_ref: (1,)     SMEM scalar.
    # o_ref: (TB, P)  VMEM output tile.
    # Compute is negligible vs. the DMA; MXU matmul (N = P <= 2) is fine here.
    acc = jnp.dot(x_ref[...], w_ref[...], preferred_element_type=jnp.float32)
    o_ref[...] = (acc + b_ref[0]).astype(o_ref.dtype)
    # TODO(synk): output is lane-sparse (P<=2 lanes); a lane-dense (1, TB)
    # layout would remove the masked vst, but output traffic is ~1.5% of input
    # traffic at F=64, so it is left simple.


def regressor_forward(x, w, b, *, target_block_bytes=2 * 1024 * 1024, block_b=None):
    """Pallas equivalent of Regressor.forward: nn.Linear(2*hidden_dim, 1)(x).

    x: (B, 2*hidden_dim) float32
    w: (1, 2*hidden_dim) float32   (torch nn.Linear weight layout)
    b: (1,) float32                (torch bias)
    returns: (B, 1) float32
    """
    x = jnp.asarray(x)
    B, F = x.shape
    dtype = x.dtype
    w_row = jnp.asarray(w, dtype).reshape(F)
    b_vec = jnp.asarray(b, dtype).reshape(1)

    # ---- feature packing: fill 128-lane vregs when F < 128 and divides 128 ----
    pack = 1
    if F < 128 and 128 % F == 0 and B % (128 // F) == 0:
        pack = 128 // F
    Fp, Bp = F * pack, B // pack
    x_in = x.reshape(Bp, Fp)  # free, contiguous reshape (no data movement)
    # Block-diagonal weight (Fp, pack): column k holds w on rows [k*F, (k+1)*F).
    # Row r of x_in packs original rows [r*pack, (r+1)*pack), so the (Bp, pack)
    # output reshapes row-major to exactly (B, 1).
    w_bd = jnp.kron(jnp.eye(pack, dtype=dtype), w_row.reshape(F, 1))

    # ---- batch tile: ~target_block_bytes of x per grid step (multiple of 8) ----
    itemsize = jnp.dtype(dtype).itemsize
    if block_b is None:
        tb = max(1, target_block_bytes // (Fp * itemsize))
    else:
        tb = max(1, block_b // pack)
    tb = min(tb, Bp)
    if Bp >= 8:
        tb = max(8, (tb // 8) * 8)       # sublane rule: multiple of 8
    else:
        tb = Bp                          # full-extent block is legal when tiny
    grid = (pl.cdiv(Bp, tb),)            # partial trailing block: no padding

    # VMEM budget: 2 pipelined x buffers (lane-padded width) + weight + output.
    lanes = ((Fp + 127) // 128) * 128
    x_buf_bytes = tb * lanes * itemsize
    vmem_limit = int(min(32 << 20, max(16 << 20, 3 * x_buf_bytes + (4 << 20))))

    out = pl.pallas_call(
        gemv_bias_kernel,
        out_shape=jax.ShapeDtypeStruct((Bp, pack), dtype),
        grid=grid,
        in_specs=[
            pl.BlockSpec((tb, Fp), lambda i: (i, 0)),            # x: streamed
            pl.BlockSpec((Fp, pack), lambda i: (0, 0)),          # weight: resident
            pl.BlockSpec(memory_space=pltpu.MemorySpace.SMEM),   # bias scalar
        ],
        out_specs=pl.BlockSpec((tb, pack), lambda i: (i, 0)),
        compiler_params=pltpu.CompilerParams(
            dimension_semantics=("parallel",),  # megacore split of batch on v7x
            vmem_limit_bytes=vmem_limit,
        ),
    )(x_in, w_bd, b_vec)
    return out.reshape(B, 1)


if __name__ == "__main__":
    hidden_dim = 32
    in_features = 2 * hidden_dim  # 64
    batch = 10  # even -> exercises the lane-packing path (pack=2, Fp=128)

    key = jax.random.PRNGKey(0)
    kx, kw, kb = jax.random.split(key, 3)

    # Parameters in torch nn.Linear(2*hidden_dim, 1) layout: W (1, 2H), b (1,).
    x = jax.random.normal(kx, (batch, in_features), dtype=jnp.float32)
    w = jax.random.normal(kw, (1, in_features), dtype=jnp.float32) * 0.1
    b = jax.random.normal(kb, (1,), dtype=jnp.float32) * 0.1

    y = jax.block_until_ready(regressor_forward(x, w, b))
    y_ref = x @ w.T + b[0]
    assert y.shape == (batch, 1)
    assert jnp.allclose(y, y_ref, atol=1e-4, rtol=1e-4)

    # Extra coverage: multi-step grid with a partial trailing block (no pad),
    # packed path.
    x2 = jax.random.normal(kx, (530, in_features), dtype=jnp.float32)
    y2 = jax.block_until_ready(regressor_forward(x2, w, b, block_b=128))
    assert jnp.allclose(y2, x2 @ w.T + b[0], atol=1e-4, rtol=1e-4)

    # Extra coverage: fallback (unpacked) path with an odd feature width and a
    # partial trailing block.
    f3 = 100
    x3 = jax.random.normal(kw, (37, f3), dtype=jnp.float32)
    w3 = jax.random.normal(kb, (1, f3), dtype=jnp.float32) * 0.1
    y3 = jax.block_until_ready(regressor_forward(x3, w3, b, block_b=16))
    assert jnp.allclose(y3, x3 @ w3.T + b[0], atol=1e-4, rtol=1e-4)

    print("KERNEL_OK")
</pallas_src>

<mosaic_0001>
module attributes {stable_mosaic.version = 11 : i64} {
  func.func @gemv_bias_kernel(%arg0: i32, %arg1: memref<5x128xf32, #tpu.memory_space<vmem>>, %arg2: memref<128x2xf32, #tpu.memory_space<vmem>>, %arg3: memref<1xf32, #tpu.memory_space<smem>>, %arg4: memref<5x2xf32, #tpu.memory_space<vmem>>) attributes {dimension_semantics = [#tpu.dimension_semantics<parallel>], iteration_bounds = array<i64: 1>, scalar_prefetch = 0 : i64, scratch_operands = 0 : i64, tpu.core_type = #tpu.core_type<tc>, window_params = [{transform_indices = @transform_0, window_bounds = array<i64: 5, 128>}, {pipeline_mode = #tpu.pipeline_mode<synchronous>, transform_indices = @transform_1, window_bounds = array<i64: 128, 2>}, {transform_indices = @transform_2, window_bounds = array<i64: 1>}, {transform_indices = @transform_3, window_bounds = array<i64: 5, 2>}]} {
    %c0 = arith.constant 0 : index
    %c0_0 = arith.constant 0 : index
    %0 = vector.load %arg1[%c0, %c0_0] : memref<5x128xf32, #tpu.memory_space<vmem>>, vector<5x128xf32>
    %c0_1 = arith.constant 0 : index
    %c0_2 = arith.constant 0 : index
    %1 = vector.load %arg2[%c0_1, %c0_2] : memref<128x2xf32, #tpu.memory_space<vmem>>, vector<128x2xf32>
    %cst = arith.constant dense<0.000000e+00> : vector<5x2xf32>
    %2 = tpu.matmul %0, %1, %cst {dimension_numbers = #tpu.dot_dimension_numbers<[1], [0], [0], [1], [0, 0, 1, 1], [], []>} : vector<5x128xf32>, vector<128x2xf32>, vector<5x2xf32> -> vector<5x2xf32>
    %c0_3 = arith.constant 0 : index
    %3 = memref.load %arg3[%c0_3] : memref<1xf32, #tpu.memory_space<smem>>
    %4 = vector.broadcast %3 : f32 to vector<5x2xf32>
    %5 = arith.addf %2, %4 : vector<5x2xf32>
    %c0_4 = arith.constant 0 : index
    %c0_5 = arith.constant 0 : index
    %6 = vector.load %arg4[%c0_4, %c0_5] : memref<5x2xf32, #tpu.memory_space<vmem>>, vector<5x2xf32>
    tpu.vector_store %arg4[%c0_4, %c0_5], %5 {strides = array<i32>} : memref<5x2xf32, #tpu.memory_space<vmem>>, vector<5x2xf32>,
    return
  }
  func.func @transform_0(%arg0: i32) -> (i32, i32) {
    %c0_i32 = arith.constant 0 : i32
    %c0_i32_0 = arith.constant 0 : i32
    return %arg0, %c0_i32 : i32, i32
  }
  func.func @transform_1(%arg0: i32) -> (i32, i32) {
    %c0_i32 = arith.constant 0 : i32
    %c0_i32_0 = arith.constant 0 : i32
    %c0_i32_1 = arith.constant 0 : i32
    return %c0_i32, %c0_i32_0 : i32, i32
  }
  func.func @transform_2(%arg0: i32) -> i32 {
    %c0_i32 = arith.constant 0 : i32
    %c0_i32_0 = arith.constant 0 : i32
    return %c0_i32 : i32
  }
  func.func @transform_3(%arg0: i32) -> (i32, i32) {
    %c0_i32 = arith.constant 0 : i32
    %c0_i32_0 = arith.constant 0 : i32
    return %arg0, %c0_i32 : i32, i32
  }
}

</mosaic_0001>

<llo_original>
// kernel: tpu_custom_call.1
$region0: #{tpu_custom_call.1}
  #allocation0 [shape = 'u32[]', space=smem, size = 0x4, offset = 0x4, fixed_abs, tag = 'smem constant byte address 0x4 - core index']
  #allocation1 [shape = 'u32[144,128]{1,0:T(1,128)}', space=vmem, size = 0x12000, scoped, tag = 'internal scratch']
  #allocation2 [shape = 'f32[1]{0:T(128)S(6)}', space=smem, size = 0x200, scoped, tag = 'scoped memory for tpu_custom_call.1']
  %s0 = inlined_call_operand.vmem [shape: f32[5,128], index: 0, kind: input, shape index: {}]
  %s1 = inlined_call_operand.vmem [shape: f32[128,2], index: 1, kind: input, shape index: {}]
  %s2 = inlined_call_operand.<no memory space> [shape: f32[1], index: 2, kind: input, shape index: {}]
  %s3 = inlined_call_operand.vmem [shape: f32[5,2], index: 3, kind: output, shape index: {}]
  %s4 = sld [smem:[#allocation0]]
  $region22: #{tpu_custom_call.1} parent=0
    _
  %s6 = ssub.s32 1, %s4
  %s7 = scalar_select 0, %s6, %s4
  %8 = sst [smem:[#allocation2]] %s2
  // Predicated region
  $region2: #{tpu_custom_call.1} parent=0 // pred_check
    _
  $region3: #{tpu_custom_call.1} parent=0 // pred_check_branch
    %10 = sbr.rel (0) target = $region5
  $region4: #{tpu_custom_call.1} parent=0 // pred_region
    _
  $region5: #{tpu_custom_call.1} parent=0 // pred_fallthru
    _
  // Predicated region
  $region6: #{tpu_custom_call.1} parent=0 // pred_check
    _
  $region7: #{tpu_custom_call.1} parent=0 // pred_check_branch
    %12 = sbr.rel (0) target = $region9
  $region8: #{tpu_custom_call.1} parent=0 // pred_region
    _
  $region9: #{tpu_custom_call.1} parent=0 // pred_fallthru
    _
  // Predicated region
  $region10: #{tpu_custom_call.1} parent=0 // pred_check
    _
  $region11: #{tpu_custom_call.1} parent=0 // pred_check_branch
    %14 = sbr.rel (0) target = $region13
  $region12: #{tpu_custom_call.1} parent=0 // pred_region
    _
  $region13: #{tpu_custom_call.1} parent=0 // pred_fallthru
    _
  %v15 = vld [vmem:[%s0] sm:$0x1f]
  %v16 = vld [vmem:[%s1] sm:$0xff]
  %v17 = vld [vmem:[%s1 + $0x8] sm:$0xff]
  %v18 = vld [vmem:[%s1 + $0x10] sm:$0xff]
  %v19 = vld [vmem:[%s1 + $0x18] sm:$0xff]
  %v20 = vld [vmem:[%s1 + $0x20] sm:$0xff]
  %v21 = vld [vmem:[%s1 + $0x28] sm:$0xff]
  %v22 = vld [vmem:[%s1 + $0x30] sm:$0xff]
  %v23 = vld [vmem:[%s1 + $0x38] sm:$0xff]
  %v24 = vld [vmem:[%s1 + $0x40] sm:$0xff]
  %v25 = vld [vmem:[%s1 + $0x48] sm:$0xff]
  %v26 = vld [vmem:[%s1 + $0x50] sm:$0xff]
  %v27 = vld [vmem:[%s1 + $0x58] sm:$0xff]
  %v28 = vld [vmem:[%s1 + $0x60] sm:$0xff]
  %v29 = vld [vmem:[%s1 + $0x68] sm:$0xff]
  %v30 = vld [vmem:[%s1 + $0x70] sm:$0xff]
  %v31 = vld [vmem:[%s1 + $0x78] sm:$0xff]
  %s32 = sld [smem:[#allocation2]]
  %v33 = vstv %s32
  %34 = vmatprep.subr.mxu0 0.0
  %35 = vmatpush1.msra.mxu0 %v16
  %36 = vmatprep.subr.mxu0 0.0
  %37 = vmatpush1.msra.mxu0 %v17
  %38 = vmatprep.subr.mxu0 0.0
  %39 = vmatpush1.msra.mxu0 %v18
  %40 = vmatprep.subr.mxu0 0.0
  %41 = vmatpush1.msra.mxu0 %v19
  %42 = vmatprep.subr.mxu0 0.0
  %43 = vmatpush1.msra.mxu0 %v20
  %44 = vmatprep.subr.mxu0 0.0
  %45 = vmatpush1.msra.mxu0 %v21
  %46 = vmatprep.subr.mxu0 0.0
  %47 = vmatpush1.msra.mxu0 %v22
  %48 = vmatprep.subr.mxu0 0.0
  %49 = vmatpush1.msra.mxu0 %v23
  %50 = vmatprep.subr.mxu0 0.0
  %51 = vmatpush1.msra.mxu0 %v24
  %52 = vmatprep.subr.mxu0 0.0
  %53 = vmatpush1.msra.mxu0 %v25
  %54 = vmatprep.subr.mxu0 0.0
  %55 = vmatpush1.msra.mxu0 %v26
  %56 = vmatprep.subr.mxu0 0.0
  %57 = vmatpush1.msra.mxu0 %v27
  %58 = vmatprep.subr.mxu0 0.0
  %59 = vmatpush1.msra.mxu0 %v28
  %60 = vmatprep.subr.mxu0 0.0
  %61 = vmatpush1.msra.mxu0 %v29
  %62 = vmatprep.subr.mxu0 0.0
  %63 = vmatpush1.msra.mxu0 %v30
  %64 = vmatprep.subr.mxu0 0.0
  %65 = vmatpush1.msra.mxu0 %v31
  %66 = vmatprep.subr.mxu0 0.0
  %67 = vmatpush1.msra.mxu0 0.0
  %68 = vmatprep.subr.mxu0 0.0
  %69 = vmatpush1.msra.mxu0 0.0
  %70 = vmatprep.subr.mxu0 0.0
  %71 = vmatpush1.msra.mxu0 0.0
  %72 = vmatprep.subr.mxu0 0.0
  %73 = vmatpush1.msra.mxu0 0.0
  %74 = vmatprep.subr.mxu0 0.0
  %75 = vmatpush1.msra.mxu0 0.0
  %76 = vmatprep.subr.mxu0 0.0
  %77 = vmatpush1.msra.mxu0 0.0
  %78 = vmatprep.subr.mxu0 0.0
  %79 = vmatpush1.msra.mxu0 0.0
  %80 = vmatprep.subr.mxu0 0.0
  %81 = vmatpush1.msra.mxu0 0.0
  %82 = vmatprep.subr.mxu0 0.0
  %83 = vmatpush1.msra.mxu0 0.0
  %84 = vmatprep.subr.mxu0 0.0
  %85 = vmatpush1.msra.mxu0 0.0
  %86 = vmatprep.subr.mxu0 0.0
  %87 = vmatpush1.msra.mxu0 0.0
  %88 = vmatprep.subr.mxu0 0.0
  %89 = vmatpush1.msra.mxu0 0.0
  %90 = vmatprep.subr.mxu0 0.0
  %91 = vmatpush1.msra.mxu0 0.0
  %92 = vmatprep.subr.mxu0 0.0
  %93 = vmatpush1.msra.mxu0 0.0
  %94 = vmatprep.subr.mxu0 0.0
  %95 = vmatpush1.msra.mxu0 0.0
  %96 = vmatprep.subr.mxu0 0.0
  %97 = vmatpush1.msra.mxu0 0.0
  %98 = vmatprep.mubr.f32.mxu0 0.0
  %99 = vmatmul.mubr.f32.gmra.mrb[0].mxu0 %v15
  %v100 = vpop.f32.mrb[0].mxu0
  %v101 = vadd.f32 %v33, %v100
  %v102 = vpop.f32.mrb[0].mxu0
  %103 = vdwg.mxu0
  %vm104 = vcmask 12288
  %105 = vst.msk [vmem:[%s3] sm:$0x1f] %vm104, %v101
  // Predicated region
  $region14: #{tpu_custom_call.1} parent=0 // pred_check
    _
  $region15: #{tpu_custom_call.1} parent=0 // pred_check_branch
    %107 = sbr.rel (0) target = $region17
  $region16: #{tpu_custom_call.1} parent=0 // pred_region
    _
  $region17: #{tpu_custom_call.1} parent=0 // pred_fallthru
    _
  // Predicated region
  $region18: #{tpu_custom_call.1} parent=0 // pred_check
    _
  $region19: #{tpu_custom_call.1} parent=0 // pred_check_branch
    %109 = sbr.rel (0) target = $region21
  $region20: #{tpu_custom_call.1} parent=0 // pred_region
    _
  $region21: #{tpu_custom_call.1} parent=0 // pred_fallthru
    _

</llo_original>
